<compile_context>
chip_gen: v7x
topology: tpu7x:2x2x1
jax: 0.10.0
libtpu: 0.0.40
codegen_flags: <defaults>
</compile_context>

<pallas_src>
import jax
import jax.numpy as jnp
from jax.experimental import pallas as pl
from jax.experimental.pallas import tpu as pltpu

# ---- config (mirrors cfg.CFG) ------------------------------------------------
IMG_SIZE = 16
CHANNELS = 3
NUM_CLASSES = 10
MEAN = jnp.asarray([0.485, 0.456, 0.406], dtype=jnp.float32)
STD = jnp.asarray([0.229, 0.224, 0.225], dtype=jnp.float32)

D = CHANNELS * IMG_SIZE * IMG_SIZE   # 768
C_PAD = 128                          # lane-dense padded class dim
NEG_MASK = -1e30                     # "minus infinity" bias for padded logits
IMG_PER_STEP = 8                     # images per grid step (2*8 = 16 LHS rows)


# ---- one-time parameter preparation (NOT per forward call) -------------------
def prepare_params(weight, bias):
    """Fold Normalize into W/b, pad classes to 128, cast W to bf16.

    weight: [D, NUM_CLASSES] f32, bias: [NUM_CLASSES] f32
    returns (w_fold [D, C_PAD] bf16, b_fold [1, C_PAD] f32).
    Padded class columns: zero weights, -1e30 bias (exp underflows to 0).
    """
    mean_pf = jnp.repeat(MEAN, IMG_SIZE * IMG_SIZE)          # [D] channel-major
    istd_pf = jnp.repeat(1.0 / STD, IMG_SIZE * IMG_SIZE)     # [D]

    w_n = istd_pf[:, None] * weight                          # Normalize scale
    b_n = bias - (mean_pf * istd_pf) @ weight                # Normalize shift

    w_fold = (jnp.zeros((D, C_PAD), jnp.float32)
              .at[:, :NUM_CLASSES].set(w_n)
              .astype(jnp.bfloat16))
    b_fold = (jnp.full((1, C_PAD), NEG_MASK, jnp.float32)
              .at[0, :NUM_CLASSES].set(b_n))
    return w_fold, b_fold


# ---- Pallas kernel -----------------------------------------------------------
def tta_kernel(x_ref, w_ref, b_ref, o_ref):
    # x_ref: [2*IMG_PER_STEP, D]  rows [0:8) = identity images, [8:16) = hflips
    # w_ref: [D, C_PAD] bf16      Normalize-folded weights (resident in VMEM)
    # b_ref: [1, C_PAD] f32       folded bias; padded classes = -1e30
    # o_ref: [IMG_PER_STEP, C_PAD] lane-dense mean softmax probabilities
    x = x_ref[...].astype(jnp.bfloat16)
    logits = jnp.dot(x, w_ref[...],
                     preferred_element_type=jnp.float32) + b_ref[...]  # [16,128]

    m = jnp.max(logits, axis=-1, keepdims=True)
    e = jnp.exp(logits - m)                       # padded lanes -> exp(-huge)=0
    p = e * pl.reciprocal(jnp.sum(e, axis=-1, keepdims=True), approx=True)

    # mean over the TTA stack: identity rows + flipped rows
    o_ref[...] = 0.5 * (p[:IMG_PER_STEP, :] + p[IMG_PER_STEP:, :])


# ---- forward wrappers --------------------------------------------------------
def tta_forward_batch(images, w_fold, b_fold):
    """images: [B, C, H, W] float32 in [0,1] -> [B, NUM_CLASSES] mean softmax."""
    B = images.shape[0]
    assert B % IMG_PER_STEP == 0, "pad batch to a multiple of IMG_PER_STEP"
    n_steps = B // IMG_PER_STEP

    ident = images.reshape(B, D).astype(jnp.float32)
    # hflip = flip along the W axis BEFORE the CHW row-major flatten
    flip = jnp.flip(images, axis=-1).reshape(B, D).astype(jnp.float32)

    # Per-chunk layout: [8 identity rows | 8 flipped rows] -> [2B, D]
    x = jnp.concatenate(
        [ident.reshape(n_steps, IMG_PER_STEP, D),
         flip.reshape(n_steps, IMG_PER_STEP, D)],
        axis=1,
    ).reshape(2 * B, D)

    rows = 2 * IMG_PER_STEP
    bytes_accessed = (x.size * 4            # streamed LHS
                      + w_fold.size * 2     # bf16 weights (DMA'd once, resident)
                      + b_fold.size * 4
                      + B * C_PAD * 4)      # output
    cost = pl.CostEstimate(
        flops=2 * (2 * B) * D * C_PAD,
        transcendentals=(2 * B) * C_PAD,
        bytes_accessed=bytes_accessed,
    )

    out = pl.pallas_call(
        tta_kernel,
        out_shape=jax.ShapeDtypeStruct((B, C_PAD), jnp.float32),
        grid=(n_steps,),
        in_specs=[
            pl.BlockSpec((rows, D), lambda i: (i, 0)),          # streamed x
            pl.BlockSpec((D, C_PAD), lambda i: (0, 0)),         # resident W
            pl.BlockSpec((1, C_PAD), lambda i: (0, 0)),         # resident b
        ],
        out_specs=pl.BlockSpec((IMG_PER_STEP, C_PAD), lambda i: (i, 0)),
        compiler_params=pltpu.CompilerParams(
            dimension_semantics=("parallel",)),                 # v7x: 2 TCs
        cost_estimate=cost,
    )(x, w_fold, b_fold)

    return out[:, :NUM_CLASSES]               # drop lane padding


def tta_forward(image_chw, w_fold, b_fold):
    """Single-image semantics of the original module: [C,H,W] -> [NUM_CLASSES]."""
    images = jnp.broadcast_to(image_chw, (IMG_PER_STEP,) + image_chw.shape)
    return tta_forward_batch(images, w_fold, b_fold)[0]


# ---- demo / correctness check ------------------------------------------------
if __name__ == "__main__":
    key = jax.random.PRNGKey(0)
    k_img, k_w, k_b = jax.random.split(key, 3)

    B = 16  # small batch; 2 grid steps of 8 images each
    images = jax.random.uniform(
        k_img, (B, CHANNELS, IMG_SIZE, IMG_SIZE), dtype=jnp.float32)  # ToTensor-like
    weight = jax.random.normal(k_w, (D, NUM_CLASSES), dtype=jnp.float32) * 0.02
    bias = jax.random.normal(k_b, (NUM_CLASSES,), dtype=jnp.float32) * 0.01

    # One-time weight preparation (fold Normalize + class padding + bf16 cast).
    w_fold, b_fold = prepare_params(weight, bias)

    out = jax.jit(tta_forward_batch)(images, w_fold, b_fold)
    out = jax.block_until_ready(out)

    out_single = jax.jit(tta_forward)(images[0], w_fold, b_fold)
    out_single = jax.block_until_ready(out_single)

    # Pure-JAX f32 reference of the original TTA pipeline.
    def ref_tta(imgs, W, b):
        mean_pf = jnp.repeat(MEAN, IMG_SIZE * IMG_SIZE)
        istd_pf = jnp.repeat(1.0 / STD, IMG_SIZE * IMG_SIZE)

        def one(img):
            def head(im):
                xn = (im.reshape(D) - mean_pf) * istd_pf
                return jax.nn.softmax(xn @ W + b)
            return 0.5 * (head(img) + head(jnp.flip(img, axis=-1)))

        return jax.vmap(one)(imgs)

    ref = ref_tta(images, weight, bias)

    assert out.shape == (B, NUM_CLASSES)
    assert out_single.shape == (NUM_CLASSES,)
    # Probabilities sum to 1 (f32 softmax; approx reciprocal -> loose tol).
    assert float(jnp.max(jnp.abs(jnp.sum(out, axis=-1) - 1.0))) < 1e-2
    # bf16 weights/LHS + approx reciprocal -> relaxed tolerance vs f32 reference.
    assert float(jnp.max(jnp.abs(out - ref))) < 1e-2
    assert float(jnp.max(jnp.abs(out_single - ref[0]))) < 1e-2
    print("KERNEL_OK")
</pallas_src>

<mosaic_0001>
module attributes {stable_mosaic.version = 11 : i64} {
  func.func @tta_kernel(%arg0: i32, %arg1: memref<16x768xf32, #tpu.memory_space<vmem>>, %arg2: memref<768x128xbf16, #tpu.memory_space<vmem>>, %arg3: memref<1x128xf32, #tpu.memory_space<vmem>>, %arg4: memref<8x128xf32, #tpu.memory_space<vmem>>) attributes {dimension_semantics = [#tpu.dimension_semantics<parallel>], iteration_bounds = array<i64: 2>, scalar_prefetch = 0 : i64, scratch_operands = 0 : i64, tpu.core_type = #tpu.core_type<tc>, window_params = [{transform_indices = @transform_0, window_bounds = array<i64: 16, 768>}, {pipeline_mode = #tpu.pipeline_mode<synchronous>, transform_indices = @transform_1, window_bounds = array<i64: 768, 128>}, {pipeline_mode = #tpu.pipeline_mode<synchronous>, transform_indices = @transform_2, window_bounds = array<i64: 1, 128>}, {transform_indices = @transform_3, window_bounds = array<i64: 8, 128>}]} {
    %c0 = arith.constant 0 : index
    %c0_0 = arith.constant 0 : index
    %0 = vector.load %arg1[%c0, %c0_0] : memref<16x768xf32, #tpu.memory_space<vmem>>, vector<16x768xf32>
    %1 = arith.truncf %0 : vector<16x768xf32> to vector<16x768xbf16>
    %c0_1 = arith.constant 0 : index
    %c0_2 = arith.constant 0 : index
    %2 = vector.load %arg2[%c0_1, %c0_2] : memref<768x128xbf16, #tpu.memory_space<vmem>>, vector<768x128xbf16>
    %cst = arith.constant dense<0.000000e+00> : vector<16x128xf32>
    %3 = tpu.matmul %1, %2, %cst {dimension_numbers = #tpu.dot_dimension_numbers<[1], [0], [0], [1], [0, 0, 1, 1], [], []>} : vector<16x768xbf16>, vector<768x128xbf16>, vector<16x128xf32> -> vector<16x128xf32>
    %c0_3 = arith.constant 0 : index
    %c0_4 = arith.constant 0 : index
    %4 = vector.load %arg3[%c0_3, %c0_4] : memref<1x128xf32, #tpu.memory_space<vmem>>, vector<1x128xf32>
    %5 = vector.broadcast %4 : vector<1x128xf32> to vector<16x128xf32>
    %6 = arith.addf %3, %5 : vector<16x128xf32>
    %cst_5 = arith.constant dense<0xFF800000> : vector<16xf32>
    %7 = vector.multi_reduction <maximumf>, %6, %cst_5 [1] : vector<16x128xf32> to vector<16xf32>
    %8 = vector.shape_cast %7 : vector<16xf32> to vector<16x1xf32>
    %9 = vector.broadcast %8 : vector<16x1xf32> to vector<16x128xf32>
    %10 = arith.subf %6, %9 : vector<16x128xf32>
    %11 = math.exp %10 : vector<16x128xf32>
    %cst_6 = arith.constant dense<0.000000e+00> : vector<16xf32>
    %12 = vector.multi_reduction <add>, %11, %cst_6 [1] : vector<16x128xf32> to vector<16xf32>
    %13 = vector.shape_cast %12 : vector<16xf32> to vector<16x1xf32>
    %14 = tpu.reciprocal %13 {approx = true} : vector<16x1xf32> -> vector<16x1xf32>
    %15 = vector.broadcast %14 : vector<16x1xf32> to vector<16x128xf32>
    %16 = arith.mulf %11, %15 : vector<16x128xf32>
    %17 = vector.extract_strided_slice %16 {offsets = [0, 0], sizes = [8, 128], strides = [1, 1]} : vector<16x128xf32> to vector<8x128xf32>
    %18 = vector.extract_strided_slice %16 {offsets = [8, 0], sizes = [8, 128], strides = [1, 1]} : vector<16x128xf32> to vector<8x128xf32>
    %19 = arith.addf %17, %18 : vector<8x128xf32>
    %cst_7 = arith.constant 5.000000e-01 : f32
    %20 = vector.broadcast %cst_7 : f32 to vector<8x128xf32>
    %21 = arith.mulf %20, %19 : vector<8x128xf32>
    %c0_8 = arith.constant 0 : index
    %c0_9 = arith.constant 0 : index
    %22 = vector.load %arg4[%c0_8, %c0_9] : memref<8x128xf32, #tpu.memory_space<vmem>>, vector<8x128xf32>
    tpu.vector_store %arg4[%c0_8, %c0_9], %21 {strides = array<i32>} : memref<8x128xf32, #tpu.memory_space<vmem>>, vector<8x128xf32>,
    return
  }
  func.func @transform_0(%arg0: i32) -> (i32, i32) {
    %c0_i32 = arith.constant 0 : i32
    %c0_i32_0 = arith.constant 0 : i32
    return %arg0, %c0_i32 : i32, i32
  }
  func.func @transform_1(%arg0: i32) -> (i32, i32) {
    %c0_i32 = arith.constant 0 : i32
    %c0_i32_0 = arith.constant 0 : i32
    %c0_i32_1 = arith.constant 0 : i32
    return %c0_i32, %c0_i32_0 : i32, i32
  }
  func.func @transform_2(%arg0: i32) -> (i32, i32) {
    %c0_i32 = arith.constant 0 : i32
    %c0_i32_0 = arith.constant 0 : i32
    %c0_i32_1 = arith.constant 0 : i32
    return %c0_i32, %c0_i32_0 : i32, i32
  }
  func.func @transform_3(%arg0: i32) -> (i32, i32) {
    %c0_i32 = arith.constant 0 : i32
    %c0_i32_0 = arith.constant 0 : i32
    return %arg0, %c0_i32 : i32, i32
  }
}

</mosaic_0001>

<llo_original>
// kernel: tta_forward_batch.1
$region0: #{tta_forward_batch.1}
  #allocation0 [shape = 'u32[]', space=smem, size = 0x4, offset = 0x4, fixed_abs, tag = 'smem constant byte address 0x4 - core index']
  #allocation1 [shape = 'u32[144,128]{1,0:T(1,128)}', space=vmem, size = 0x12000, scoped, tag = 'internal scratch']
  %s0 = inlined_call_operand.vmem [shape: f32[32,768], index: 0, kind: input, shape index: {}]
  %s1 = inlined_call_operand.vmem [shape: bf16[768,128], index: 1, kind: input, shape index: {}]
  %s2 = inlined_call_operand.vmem [shape: f32[1,128], index: 2, kind: input, shape index: {}]
  %s3 = inlined_call_operand.hbm [shape: f32[16,128], index: 3, kind: output, shape index: {}]
  %s4 = sld [smem:[#allocation0]]
  $region45: #{tta_forward_batch.1} parent=0
    _
  %s6 = ssub.s32 1, %s4
  %s7 = scalar_select 0, %s6, %s4
  $region1: #{tta_forward_batch.1} parent=0
    #allocation2 [shape = 'u8[8192]{0}', space=vmem, size = 0x2000, scoped, tag = 'output window, operand 0']
    #allocation3 [shape = 's32[2]{0}', space=sflag, size = 0x8, scoped, tag = 'scoped memory for tta_forward_batch.1']
    %8 = vsyncpa [#allocation3], 0
    %s9 = scalar_lea.sflag [#allocation3], 1
    %10 = vsyncpa %s9, 0
    loop: start=0, step=1, limit=4
    $region2: #{tta_forward_batch.1} parent=1 // loop_pre_header
      _
    $region3: #{tta_forward_batch.1} parent=1 // loop_header
      %s12 = sphi 0, %s16
      %p13 = scmp.ge.s32.totalorder %s12, 4
      %s22 = sphi 0, %s24
      %s25 = sphi 0, %s22
      %s26 = sphi 0, %s25
      %s42 = sphi 0, %s26
      %s46 = sphi 0, %s46
      %s48 = sphi 0, %s46
      %s49 = sphi 0, %s48
      %s63 = sphi 0, %s49
      %s67 = sphi 0, %s67
      %s69 = sphi 0, %s67
      %s70 = sphi 0, %s69
      %s84 = sphi 0, %s70
      %s90 = sphi 0, %s92
      %s93 = sphi 0, %s90
      %s94 = sphi 0, %s93
      %s110 = sphi 0, %s94
    $region4: #{tta_forward_batch.1} parent=1 // loop_header_branch
      %15 = sbr.rel (%p13) target = $region8
    $region5: #{tta_forward_batch.1} parent=1 // loop_body
      %s17 = ssub.s32 %s12, 1
      %s18 = ssub.s32 %s12, 2
      %s19 = sadd.s32 %s12, 1
      %s20 = ssub.s32 %s12, %s19
      %p21 = scmp.eq.s32.totalorder %s20, 0
      %s23 = sadd.s32 %s22, 1
      %s24 = scalar_select %p21, %s22, %s23
      %p27 = pneg %p21
      %p28 = scmp.eq.s32.totalorder %s12, 1
      %p29 = por %p27, %p28
      %p30 = scmp.ne.s32.totalorder %s22, %s25
      %p31 = scmp.eq.s32.totalorder %s12, 0
      %p32 = por %p30, %p31
      %p33 = scmp.ne.s32.totalorder %s22, %s25
      %p34 = scmp.eq.s32.totalorder %s17, 1
      %p35 = por %p33, %p34
      %p36 = scmp.ne.s32.totalorder %s25, %s26
      %p37 = scmp.eq.s32.totalorder %s17, 0
      %p38 = por %p36, %p37
      %p39 = scmp.ne.s32.totalorder %s25, %s26
      %p40 = scmp.eq.s32.totalorder %s18, 1
      %p41 = por %p39, %p40
      %p43 = scmp.ne.s32.totalorder %s26, %s42
      %p44 = scmp.eq.s32.totalorder %s18, 0
      %p45 = por %p43, %p44
      %s47 = sadd.s32 %s46, 1
      %p50 = scmp.eq.s32.totalorder %s12, 1
      %p51 = scmp.ne.s32.totalorder %s46, %s48
      %p52 = scmp.eq.s32.totalorder %s12, 0
      %p53 = por %p51, %p52
      %p54 = scmp.ne.s32.totalorder %s46, %s48
      %p55 = scmp.eq.s32.totalorder %s17, 1
      %p56 = por %p54, %p55
      %p57 = scmp.ne.s32.totalorder %s48, %s49
      %p58 = scmp.eq.s32.totalorder %s17, 0
      %p59 = por %p57, %p58
      %p60 = scmp.ne.s32.totalorder %s48, %s49
      %p61 = scmp.eq.s32.totalorder %s18, 1
      %p62 = por %p60, %p61
      %p64 = scmp.ne.s32.totalorder %s49, %s63
      %p65 = scmp.eq.s32.totalorder %s18, 0
      %p66 = por %p64, %p65
      %s68 = sadd.s32 %s67, 1
      %p71 = scmp.eq.s32.totalorder %s12, 1
      %p72 = scmp.ne.s32.totalorder %s67, %s69
      %p73 = scmp.eq.s32.totalorder %s12, 0
      %p74 = por %p72, %p73
      %p75 = scmp.ne.s32.totalorder %s67, %s69
      %p76 = scmp.eq.s32.totalorder %s17, 1
      %p77 = por %p75, %p76
      %p78 = scmp.ne.s32.totalorder %s69, %s70
      %p79 = scmp.eq.s32.totalorder %s17, 0
      %p80 = por %p78, %p79
      %p81 = scmp.ne.s32.totalorder %s69, %s70
      %p82 = scmp.eq.s32.totalorder %s18, 1
      %p83 = por %p81, %p82
      %p85 = scmp.ne.s32.totalorder %s70, %s84
      %p86 = scmp.eq.s32.totalorder %s18, 0
      %p87 = por %p85, %p86
      %s88 = ssub.s32 %s12, %s19
      %p89 = scmp.eq.s32.totalorder %s88, 0
      %s91 = sadd.s32 %s90, 1
      %s92 = scalar_select %p89, %s90, %s91
      %p95 = pneg %p89
      %p96 = scmp.eq.s32.totalorder %s12, 1
      %p97 = por %p95, %p96
      %p98 = scmp.ne.s32.totalorder %s90, %s93
      %p99 = scmp.eq.s32.totalorder %s12, 0
      %p100 = por %p98, %p99
      %p101 = scmp.ne.s32.totalorder %s90, %s93
      %p102 = scmp.eq.s32.totalorder %s17, 1
      %p103 = por %p101, %p102
      %p104 = scmp.ne.s32.totalorder %s93, %s94
      %p105 = scmp.eq.s32.totalorder %s17, 0
      %p106 = por %p104, %p105
      %p107 = scmp.ne.s32.totalorder %s93, %s94
      %p108 = scmp.eq.s32.totalorder %s18, 1
      %p109 = por %p107, %p108
      %p111 = scmp.ne.s32.totalorder %s94, %s110
      %p112 = scmp.eq.s32.totalorder %s18, 0
      %p113 = por %p111, %p112
      %p114 = scmp.le.s32.totalorder 1, %s12
      %p115 = scmp.lt.s32.totalorder %s12, 3
      %p116 = pnand %p114, %p115
      %p117 = pneg %p116
      // Predicated region
      $region9: #{tta_forward_batch.1} parent=5 // pred_check
        _
      $region10: #{tta_forward_batch.1} parent=5 // pred_check_branch
        %119 = sbr.rel (%p116) target = $region12
      $region11: #{tta_forward_batch.1} parent=5 // pred_region
        %s120 = ssub.s32 %s12, 1
        // Predicated region
        $region13: #{tta_forward_batch.1} parent=11 // pred_check
          %p121 = pneg %p59
        $region14: #{tta_forward_batch.1} parent=11 // pred_check_branch
          %123 = sbr.rel (%p121) target = $region16
        $region15: #{tta_forward_batch.1} parent=11 // pred_region
          _
        $region16: #{tta_forward_batch.1} parent=11 // pred_fallthru
          _
        // Predicated region
        $region17: #{tta_forward_batch.1} parent=11 // pred_check
          %p124 = pneg %p80
        $region18: #{tta_forward_batch.1} parent=11 // pred_check_branch
          %126 = sbr.rel (%p124) target = $region20
        $region19: #{tta_forward_batch.1} parent=11 // pred_region
          _
        $region20: #{tta_forward_batch.1} parent=11 // pred_fallthru
          _
      $region12: #{tta_forward_batch.1} parent=5 // pred_fallthru
        _
      %p127 = scmp.lt.s32.totalorder %s12, 2
      // Predicated region
      $region21: #{tta_forward_batch.1} parent=5 // pred_check
        %p128 = pneg %p127
      $region22: #{tta_forward_batch.1} parent=5 // pred_check_branch
        %130 = sbr.rel (%p128) target = $region24
      $region23: #{tta_forward_batch.1} parent=5 // pred_region
        // Predicated region
        $region25: #{tta_forward_batch.1} parent=23 // pred_check
          %p131 = pneg %p32
        $region26: #{tta_forward_batch.1} parent=23 // pred_check_branch
          %133 = sbr.rel (%p131) target = $region28
        $region27: #{tta_forward_batch.1} parent=23 // pred_region
          %s134 = smul.u32 2, %s12
          %p135 = scmp.lt.s32.totalorder %s134, 3
          %s136 = scalar_select %p135, %s134, 3
          %s137 = smul.addr %s136, 6
          %s138 = smul.addr %s137, 8
          %s139 = scalar_lea.vmem %s0, %s138
          %s140 = smul.u32 2, %s12
        $region28: #{tta_forward_batch.1} parent=23 // pred_fallthru
          _
      $region24: #{tta_forward_batch.1} parent=5 // pred_fallthru
        _
      %p141 = scmp.le.s32.totalorder 1, %s12
      %p142 = scmp.lt.s32.totalorder %s12, 3
      %p143 = pnand %p141, %p142
      %p144 = pneg %p143
      // Predicated region
      $region29: #{tta_forward_batch.1} parent=5 // pred_check
        _
      $region30: #{tta_forward_batch.1} parent=5 // pred_check_branch
        %146 = sbr.rel (%p143) target = $region32
      $region31: #{tta_forward_batch.1} parent=5 // pred_region
        %s147 = ssub.s32 %s12, 1
        %s148 = smul.u32 2, %s17
        %p149 = scmp.lt.s32.totalorder %s148, 3
        %s150 = scalar_select %p149, %s148, 3
        %s151 = smul.addr %s150, 6
        %s152 = smul.addr %s151, 8
        %s153 = scalar_lea.vmem %s0, %s152
        %p154 = pneg %p38
        %p155 = pneg %p35
        %p156 = pneg %p59
        %p157 = pneg %p56
        %p158 = pneg %p80
        %p159 = pneg %p77
        %p160 = pneg %p106
        %p161 = pneg %p103
        %s162 = sand.u32 %s93, 1
        %s163 = scalar_lea.sflag [#allocation3], %s162
        %s164 = sand.u32 %s93, 1
        %s165 = smul.addr %s164, 8
        %s166 = scalar_lea.vmem [#allocation2], %s165
        %s167 = smul.u32 2, %s17
        %p168 = scmp.lt.s32.totalorder %s167, 3
        %s169 = scalar_select %p168, %s167, 3
        %s170 = smul.addr %s169, 6
        %s171 = smul.addr %s170, 8
        %s172 = scalar_lea.vmem %s0, %s171
        %s173 = smul.u32 2, %s17
        %v175 = vld [vmem:[%s172] sm:$0xff]
        %v176 = vld [vmem:[%s172 + $0x8] sm:$0xff]
        %v177 = vld [vmem:[%s172 + $0x10] sm:$0xff]
        %v178 = vld [vmem:[%s172 + $0x18] sm:$0xff]
        %v179 = vld [vmem:[%s172 + $0x20] sm:$0xff]
        %v180 = vld [vmem:[%s172 + $0x28] sm:$0xff]
        %v181 = vld [vmem:[%s172 + $0x30] sm:$0xff]
        %v182 = vld [vmem:[%s172 + $0x38] sm:$0xff]
        %v183 = vld [vmem:[%s172 + $0x40] sm:$0xff]
        %v184 = vld [vmem:[%s172 + $0x48] sm:$0xff]
        %v185 = vld [vmem:[%s172 + $0x50] sm:$0xff]
        %v186 = vld [vmem:[%s172 + $0x58] sm:$0xff]
        %v187 = vpack.c.bf16 %v181, %v175
        %v188 = vpack.c.bf16 %v182, %v176
        %v189 = vpack.c.bf16 %v183, %v177
        %v190 = vpack.c.bf16 %v184, %v178
        %v191 = vpack.c.bf16 %v185, %v179
        %v192 = vpack.c.bf16 %v186, %v180
        %v193 = vld [vmem:[%s1] sm:$0xf]
        %v194 = vld [vmem:[%s1 + $0x4] sm:$0xf]
        %v195 = vld [vmem:[%s1 + $0x8] sm:$0xf]
        %v196 = vld [vmem:[%s1 + $0xc] sm:$0xf]
        %v197 = vld [vmem:[%s1 + $0x10] sm:$0xf]
        %v198 = vld [vmem:[%s1 + $0x14] sm:$0xf]
        %v199 = vld [vmem:[%s1 + $0x18] sm:$0xf]
        %v200 = vld [vmem:[%s1 + $0x1c] sm:$0xf]
        %v201 = vld [vmem:[%s1 + $0x20] sm:$0xf]
        %v202 = vld [vmem:[%s1 + $0x24] sm:$0xf]
        %v203 = vld [vmem:[%s1 + $0x28] sm:$0xf]
        %v204 = vld [vmem:[%s1 + $0x2c] sm:$0xf]
        %v205 = vld [vmem:[%s1 + $0x30] sm:$0xf]
        %v206 = vld [vmem:[%s1 + $0x34] sm:$0xf]
        %v207 = vld [vmem:[%s1 + $0x38] sm:$0xf]
        %v208 = vld [vmem:[%s1 + $0x3c] sm:$0xf]
        %v209 = vld [vmem:[%s1 + $0x40] sm:$0xf]
        %v210 = vld [vmem:[%s1 + $0x44] sm:$0xf]
        %v211 = vld [vmem:[%s1 + $0x48] sm:$0xf]
        %v212 = vld [vmem:[%s1 + $0x4c] sm:$0xf]
        %v213 = vld [vmem:[%s1 + $0x50] sm:$0xf]
        %v214 = vld [vmem:[%s1 + $0x54] sm:$0xf]
        %v215 = vld [vmem:[%s1 + $0x58] sm:$0xf]
        %v216 = vld [vmem:[%s1 + $0x5c] sm:$0xf]
        %v217 = vld [vmem:[%s1 + $0x60] sm:$0xf]
        %v218 = vld [vmem:[%s1 + $0x64] sm:$0xf]
        %v219 = vld [vmem:[%s1 + $0x68] sm:$0xf]
        %v220 = vld [vmem:[%s1 + $0x6c] sm:$0xf]
        %v221 = vld [vmem:[%s1 + $0x70] sm:$0xf]
        %v222 = vld [vmem:[%s1 + $0x74] sm:$0xf]
        %v223 = vld [vmem:[%s1 + $0x78] sm:$0xf]
        %v224 = vld [vmem:[%s1 + $0x7c] sm:$0xf]
        %v225 = vld [vmem:[%s1 + $0x80] sm:$0xf]
        %v226 = vld [vmem:[%s1 + $0x84] sm:$0xf]
        %v227 = vld [vmem:[%s1 + $0x88] sm:$0xf]
        %v228 = vld [vmem:[%s1 + $0x8c] sm:$0xf]
        %v229 = vld [vmem:[%s1 + $0x90] sm:$0xf]
        %v230 = vld [vmem:[%s1 + $0x94] sm:$0xf]
        %v231 = vld [vmem:[%s1 + $0x98] sm:$0xf]
        %v232 = vld [vmem:[%s1 + $0x9c] sm:$0xf]
        %v233 = vld [vmem:[%s1 + $0xa0] sm:$0xf]
        %v234 = vld [vmem:[%s1 + $0xa4] sm:$0xf]
        %v235 = vld [vmem:[%s1 + $0xa8] sm:$0xf]
        %v236 = vld [vmem:[%s1 + $0xac] sm:$0xf]
        %v237 = vld [vmem:[%s1 + $0xb0] sm:$0xf]
        %v238 = vld [vmem:[%s1 + $0xb4] sm:$0xf]
        %v239 = vld [vmem:[%s1 + $0xb8] sm:$0xf]
        %v240 = vld [vmem:[%s1 + $0xbc] sm:$0xf]
        %v241 = vld [vmem:[%s1 + $0xc0] sm:$0xf]
        %v242 = vld [vmem:[%s1 + $0xc4] sm:$0xf]
        %v243 = vld [vmem:[%s1 + $0xc8] sm:$0xf]
        %v244 = vld [vmem:[%s1 + $0xcc] sm:$0xf]
        %v245 = vld [vmem:[%s1 + $0xd0] sm:$0xf]
        %v246 = vld [vmem:[%s1 + $0xd4] sm:$0xf]
        %v247 = vld [vmem:[%s1 + $0xd8] sm:$0xf]
        %v248 = vld [vmem:[%s1 + $0xdc] sm:$0xf]
        %v249 = vld [vmem:[%s1 + $0xe0] sm:$0xf]
        %v250 = vld [vmem:[%s1 + $0xe4] sm:$0xf]
        %v251 = vld [vmem:[%s1 + $0xe8] sm:$0xf]
        %v252 = vld [vmem:[%s1 + $0xec] sm:$0xf]
        %v253 = vld [vmem:[%s1 + $0xf0] sm:$0xf]
        %v254 = vld [vmem:[%s1 + $0xf4] sm:$0xf]
        %v255 = vld [vmem:[%s1 + $0xf8] sm:$0xf]
        %v256 = vld [vmem:[%s1 + $0xfc] sm:$0xf]
        %v257 = vld [vmem:[%s1 + $0x100] sm:$0xf]
        %v258 = vld [vmem:[%s1 + $0x104] sm:$0xf]
        %v259 = vld [vmem:[%s1 + $0x108] sm:$0xf]
        %v260 = vld [vmem:[%s1 + $0x10c] sm:$0xf]
        %v261 = vld [vmem:[%s1 + $0x110] sm:$0xf]
        %v262 = vld [vmem:[%s1 + $0x114] sm:$0xf]
        %v263 = vld [vmem:[%s1 + $0x118] sm:$0xf]
        %v264 = vld [vmem:[%s1 + $0x11c] sm:$0xf]
        %v265 = vld [vmem:[%s1 + $0x120] sm:$0xf]
        %v266 = vld [vmem:[%s1 + $0x124] sm:$0xf]
        %v267 = vld [vmem:[%s1 + $0x128] sm:$0xf]
        %v268 = vld [vmem:[%s1 + $0x12c] sm:$0xf]
        %v269 = vld [vmem:[%s1 + $0x130] sm:$0xf]
        %v270 = vld [vmem:[%s1 + $0x134] sm:$0xf]
        %v271 = vld [vmem:[%s1 + $0x138] sm:$0xf]
        %v272 = vld [vmem:[%s1 + $0x13c] sm:$0xf]
        %v273 = vld [vmem:[%s1 + $0x140] sm:$0xf]
        %v274 = vld [vmem:[%s1 + $0x144] sm:$0xf]
        %v275 = vld [vmem:[%s1 + $0x148] sm:$0xf]
        %v276 = vld [vmem:[%s1 + $0x14c] sm:$0xf]
        %v277 = vld [vmem:[%s1 + $0x150] sm:$0xf]
        %v278 = vld [vmem:[%s1 + $0x154] sm:$0xf]
        %v279 = vld [vmem:[%s1 + $0x158] sm:$0xf]
        %v280 = vld [vmem:[%s1 + $0x15c] sm:$0xf]
        %v281 = vld [vmem:[%s1 + $0x160] sm:$0xf]
        %v282 = vld [vmem:[%s1 + $0x164] sm:$0xf]
        %v283 = vld [vmem:[%s1 + $0x168] sm:$0xf]
        %v284 = vld [vmem:[%s1 + $0x16c] sm:$0xf]
        %v285 = vld [vmem:[%s1 + $0x170] sm:$0xf]
        %v286 = vld [vmem:[%s1 + $0x174] sm:$0xf]
        %v287 = vld [vmem:[%s1 + $0x178] sm:$0xf]
        %v288 = vld [vmem:[%s1 + $0x17c] sm:$0xf]
        %v289 = vld [vmem:[%s2] sm:$0x1]
        %v291 = vlaneseq
        %v292 = vshrl.u32 %v291, 7
        %v293 = vsub.s32 0, %v292
        %v294 = vrot.slane %v289, %v293
        %v392 = vunpack.c.l.b16 %v193
        %v393 = vunpack.c.l.b16 %v194
        %v394 = vunpack.c.l.b16 %v195
        %v395 = vunpack.c.l.b16 %v196
        %v396 = vunpack.c.l.b16 %v197
        %v397 = vunpack.c.l.b16 %v198
        %v398 = vunpack.c.l.b16 %v199
        %v399 = vunpack.c.l.b16 %v200
        %v400 = vunpack.c.l.b16 %v201
        %v401 = vunpack.c.l.b16 %v202
        %v402 = vunpack.c.l.b16 %v203
        %v403 = vunpack.c.l.b16 %v204
        %v404 = vunpack.c.l.b16 %v205
        %v405 = vunpack.c.l.b16 %v206
        %v406 = vunpack.c.l.b16 %v207
        %v407 = vunpack.c.l.b16 %v208
        %v408 = vunpack.c.l.b16 %v209
        %v409 = vunpack.c.l.b16 %v210
        %v410 = vunpack.c.l.b16 %v211
        %v411 = vunpack.c.l.b16 %v212
        %v412 = vunpack.c.l.b16 %v213
        %v413 = vunpack.c.l.b16 %v214
        %v414 = vunpack.c.l.b16 %v215
        %v415 = vunpack.c.l.b16 %v216
        %v416 = vunpack.c.l.b16 %v217
        %v417 = vunpack.c.l.b16 %v218
        %v418 = vunpack.c.l.b16 %v219
        %v419 = vunpack.c.l.b16 %v220
        %v420 = vunpack.c.l.b16 %v221
        %v421 = vunpack.c.l.b16 %v222
        %v422 = vunpack.c.l.b16 %v223
        %v423 = vunpack.c.l.b16 %v224
        %v424 = vunpack.c.l.b16 %v225
        %v425 = vunpack.c.l.b16 %v226
        %v426 = vunpack.c.l.b16 %v227
        %v427 = vunpack.c.l.b16 %v228
        %v428 = vunpack.c.l.b16 %v229
        %v429 = vunpack.c.l.b16 %v230
        %v430 = vunpack.c.l.b16 %v231
        %v431 = vunpack.c.l.b16 %v232
        %v432 = vunpack.c.l.b16 %v233
        %v433 = vunpack.c.l.b16 %v234
        %v434 = vunpack.c.l.b16 %v235
        %v435 = vunpack.c.l.b16 %v236
        %v436 = vunpack.c.l.b16 %v237
        %v437 = vunpack.c.l.b16 %v238
        %v438 = vunpack.c.l.b16 %v239
        %v439 = vunpack.c.l.b16 %v240
        %v440 = vunpack.c.l.b16 %v241
        %v441 = vunpack.c.l.b16 %v242
        %v442 = vunpack.c.l.b16 %v243
        %v443 = vunpack.c.l.b16 %v244
        %v444 = vunpack.c.l.b16 %v245
        %v445 = vunpack.c.l.b16 %v246
        %v446 = vunpack.c.l.b16 %v247
        %v447 = vunpack.c.l.b16 %v248
        %v448 = vunpack.c.l.b16 %v249
        %v449 = vunpack.c.l.b16 %v250
        %v450 = vunpack.c.l.b16 %v251
        %v451 = vunpack.c.l.b16 %v252
        %v452 = vunpack.c.l.b16 %v253
        %v453 = vunpack.c.l.b16 %v254
        %v454 = vunpack.c.l.b16 %v255
        %v455 = vunpack.c.l.b16 %v256
        %v456 = vunpack.c.l.b16 %v257
        %v457 = vunpack.c.l.b16 %v258
        %v458 = vunpack.c.l.b16 %v259
        %v459 = vunpack.c.l.b16 %v260
        %v460 = vunpack.c.l.b16 %v261
        %v461 = vunpack.c.l.b16 %v262
        %v462 = vunpack.c.l.b16 %v263
        %v463 = vunpack.c.l.b16 %v264
        %v464 = vunpack.c.l.b16 %v265
        %v465 = vunpack.c.l.b16 %v266
        %v466 = vunpack.c.l.b16 %v267
        %v467 = vunpack.c.l.b16 %v268
        %v468 = vunpack.c.l.b16 %v269
        %v469 = vunpack.c.l.b16 %v270
        %v470 = vunpack.c.l.b16 %v271
        %v471 = vunpack.c.l.b16 %v272
        %v472 = vunpack.c.l.b16 %v273
        %v473 = vunpack.c.l.b16 %v274
        %v474 = vunpack.c.l.b16 %v275
        %v475 = vunpack.c.l.b16 %v276
        %v476 = vunpack.c.l.b16 %v277
        %v477 = vunpack.c.l.b16 %v278
        %v478 = vunpack.c.l.b16 %v279
        %v479 = vunpack.c.l.b16 %v280
        %v480 = vunpack.c.l.b16 %v281
        %v481 = vunpack.c.l.b16 %v282
        %v482 = vunpack.c.l.b16 %v283
        %v483 = vunpack.c.l.b16 %v284
        %v484 = vunpack.c.l.b16 %v285
        %v485 = vunpack.c.l.b16 %v286
        %v486 = vunpack.c.l.b16 %v287
        %v487 = vunpack.c.l.b16 %v288
        %v488 = vpack.c.b16 %v393, %v392
        %v489 = vpack.c.b16 %v395, %v394
        %v490 = vpack.c.b16 %v397, %v396
        %v491 = vpack.c.b16 %v399, %v398
        %v492 = vpack.c.b16 %v401, %v400
        %v493 = vpack.c.b16 %v403, %v402
        %v494 = vpack.c.b16 %v405, %v404
        %v495 = vpack.c.b16 %v407, %v406
        %v496 = vpack.c.b16 %v409, %v408
        %v497 = vpack.c.b16 %v411, %v410
        %v498 = vpack.c.b16 %v413, %v412
        %v499 = vpack.c.b16 %v415, %v414
        %v500 = vpack.c.b16 %v417, %v416
        %v501 = vpack.c.b16 %v419, %v418
        %v502 = vpack.c.b16 %v421, %v420
        %v503 = vpack.c.b16 %v423, %v422
        %v504 = vpack.c.b16 %v425, %v424
        %v505 = vpack.c.b16 %v427, %v426
        %v506 = vpack.c.b16 %v429, %v428
        %v507 = vpack.c.b16 %v431, %v430
        %v508 = vpack.c.b16 %v433, %v432
        %v509 = vpack.c.b16 %v435, %v434
        %v510 = vpack.c.b16 %v437, %v436
        %v511 = vpack.c.b16 %v439, %v438
        %v512 = vpack.c.b16 %v441, %v440
        %v513 = vpack.c.b16 %v443, %v442
        %v514 = vpack.c.b16 %v445, %v444
        %v515 = vpack.c.b16 %v447, %v446
        %v516 = vpack.c.b16 %v449, %v448
        %v517 = vpack.c.b16 %v451, %v450
        %v518 = vpack.c.b16 %v453, %v452
        %v519 = vpack.c.b16 %v455, %v454
        %v520 = vpack.c.b16 %v457, %v456
        %v521 = vpack.c.b16 %v459, %v458
        %v522 = vpack.c.b16 %v461, %v460
        %v523 = vpack.c.b16 %v463, %v462
        %v524 = vpack.c.b16 %v465, %v464
        %v525 = vpack.c.b16 %v467, %v466
        %v526 = vpack.c.b16 %v469, %v468
        %v527 = vpack.c.b16 %v471, %v470
        %v528 = vpack.c.b16 %v473, %v472
        %v529 = vpack.c.b16 %v475, %v474
        %v530 = vpack.c.b16 %v477, %v476
        %v531 = vpack.c.b16 %v479, %v478
        %v532 = vpack.c.b16 %v481, %v480
        %v533 = vpack.c.b16 %v483, %v482
        %v534 = vpack.c.b16 %v485, %v484
        %v535 = vpack.c.b16 %v487, %v486
        %584 = vmatprep.subr.bf16.mxu0 0
        %585 = vmatpush1.bf16.msra.mxu0 %v488
        %586 = vmatprep.subr.bf16.mxu0 0
        %587 = vmatpush1.bf16.msra.mxu0 %v489
        %588 = vmatprep.subr.bf16.mxu0 0
        %589 = vmatpush1.bf16.msra.mxu0 %v490
        %590 = vmatprep.subr.bf16.mxu0 0
        %591 = vmatpush1.bf16.msra.mxu0 %v491
        %592 = vmatprep.subr.bf16.mxu0 0
        %593 = vmatpush1.bf16.msra.mxu0 %v492
        %594 = vmatprep.subr.bf16.mxu0 0
        %595 = vmatpush1.bf16.msra.mxu0 %v493
        %596 = vmatprep.subr.bf16.mxu0 0
        %597 = vmatpush1.bf16.msra.mxu0 %v494
        %598 = vmatprep.subr.bf16.mxu0 0
        %599 = vmatpush1.bf16.msra.mxu0 %v495
        %600 = vmatprep.subr.bf16.mxu0 0
        %601 = vmatpush1.bf16.msra.mxu0 %v496
        %602 = vmatprep.subr.bf16.mxu0 0
        %603 = vmatpush1.bf16.msra.mxu0 %v497
        %604 = vmatprep.subr.bf16.mxu0 0
        %605 = vmatpush1.bf16.msra.mxu0 %v498
        %606 = vmatprep.subr.bf16.mxu0 0
        %607 = vmatpush1.bf16.msra.mxu0 %v499
        %608 = vmatprep.subr.bf16.mxu0 0
        %609 = vmatpush1.bf16.msra.mxu0 %v500
        %610 = vmatprep.subr.bf16.mxu0 0
        %611 = vmatpush1.bf16.msra.mxu0 %v501
        %612 = vmatprep.subr.bf16.mxu0 0
        %613 = vmatpush1.bf16.msra.mxu0 %v502
        %614 = vmatprep.subr.bf16.mxu0 0
        %615 = vmatpush1.bf16.msra.mxu0 %v503
        %616 = vmatprep.mubr.bf16.mxu0 %v188
        %617 = vmatmul.mubr.bf16.gmra.mrb[0].mxu0 %v187
        %v618 = vpop.f32.mrb[0].mxu0
        %v619 = vadd.f32 %v294, %v618
        %v620 = vpop.f32.mrb[0].mxu0
        %v621 = vpop.f32.mrb[0].mxu0
        %v622 = vadd.f32 %v294, %v621
        %v623 = vpop.f32.mrb[0].mxu0
        %624 = vdwg.mxu0
        %625 = vmatprep.subr.bf16.mxu0 0
        %626 = vmatpush1.bf16.msra.mxu0 %v504
        %627 = vmatprep.subr.bf16.mxu0 0
        %628 = vmatpush1.bf16.msra.mxu0 %v505
        %629 = vmatprep.subr.bf16.mxu0 0
        %630 = vmatpush1.bf16.msra.mxu0 %v506
        %631 = vmatprep.subr.bf16.mxu0 0
        %632 = vmatpush1.bf16.msra.mxu0 %v507
        %633 = vmatprep.subr.bf16.mxu0 0
        %634 = vmatpush1.bf16.msra.mxu0 %v508
        %635 = vmatprep.subr.bf16.mxu0 0
        %636 = vmatpush1.bf16.msra.mxu0 %v509
        %637 = vmatprep.subr.bf16.mxu0 0
        %638 = vmatpush1.bf16.msra.mxu0 %v510
        %639 = vmatprep.subr.bf16.mxu0 0
        %640 = vmatpush1.bf16.msra.mxu0 %v511
        %641 = vmatprep.subr.bf16.mxu0 0
        %642 = vmatpush1.bf16.msra.mxu0 %v512
        %643 = vmatprep.subr.bf16.mxu0 0
        %644 = vmatpush1.bf16.msra.mxu0 %v513
        %645 = vmatprep.subr.bf16.mxu0 0
        %646 = vmatpush1.bf16.msra.mxu0 %v514
        %647 = vmatprep.subr.bf16.mxu0 0
        %648 = vmatpush1.bf16.msra.mxu0 %v515
        %649 = vmatprep.subr.bf16.mxu0 0
        %650 = vmatpush1.bf16.msra.mxu0 %v516
        %651 = vmatprep.subr.bf16.mxu0 0
        %652 = vmatpush1.bf16.msra.mxu0 %v517
        %653 = vmatprep.subr.bf16.mxu0 0
        %654 = vmatpush1.bf16.msra.mxu0 %v518
        %655 = vmatprep.subr.bf16.mxu0 0
        %656 = vmatpush1.bf16.msra.mxu0 %v519
        %657 = vmatprep.mubr.bf16.mxu0 %v190
        %658 = vmatmul.mubr.bf16.gmra.mrb[0].mxu0 %v189
        %v659 = vpop.f32.mrb[0].mxu0
        %v660 = vadd.f32 %v619, %v659
        %v661 = vpop.f32.mrb[0].mxu0
        %v662 = vpop.f32.mrb[0].mxu0
        %v663 = vadd.f32 %v622, %v662
        %v664 = vpop.f32.mrb[0].mxu0
        %665 = vdwg.mxu0
        %666 = vmatprep.subr.bf16.mxu0 0
        %667 = vmatpush1.bf16.msra.mxu0 %v520
        %668 = vmatprep.subr.bf16.mxu0 0
        %669 = vmatpush1.bf16.msra.mxu0 %v521
        %670 = vmatprep.subr.bf16.mxu0 0
        %671 = vmatpush1.bf16.msra.mxu0 %v522
        %672 = vmatprep.subr.bf16.mxu0 0
        %673 = vmatpush1.bf16.msra.mxu0 %v523
        %674 = vmatprep.subr.bf16.mxu0 0
        %675 = vmatpush1.bf16.msra.mxu0 %v524
        %676 = vmatprep.subr.bf16.mxu0 0
        %677 = vmatpush1.bf16.msra.mxu0 %v525
        %678 = vmatprep.subr.bf16.mxu0 0
        %679 = vmatpush1.bf16.msra.mxu0 %v526
        %680 = vmatprep.subr.bf16.mxu0 0
        %681 = vmatpush1.bf16.msra.mxu0 %v527
        %682 = vmatprep.subr.bf16.mxu0 0
        %683 = vmatpush1.bf16.msra.mxu0 %v528
        %684 = vmatprep.subr.bf16.mxu0 0
        %685 = vmatpush1.bf16.msra.mxu0 %v529
        %686 = vmatprep.subr.bf16.mxu0 0
        %687 = vmatpush1.bf16.msra.mxu0 %v530
        %688 = vmatprep.subr.bf16.mxu0 0
        %689 = vmatpush1.bf16.msra.mxu0 %v531
        %690 = vmatprep.subr.bf16.mxu0 0
        %691 = vmatpush1.bf16.msra.mxu0 %v532
        %692 = vmatprep.subr.bf16.mxu0 0
        %693 = vmatpush1.bf16.msra.mxu0 %v533
        %694 = vmatprep.subr.bf16.mxu0 0
        %695 = vmatpush1.bf16.msra.mxu0 %v534
        %696 = vmatprep.subr.bf16.mxu0 0
        %697 = vmatpush1.bf16.msra.mxu0 %v535
        %698 = vmatprep.mubr.bf16.mxu0 %v192
        %699 = vmatmul.mubr.bf16.gmra.mrb[0].mxu0 %v191
        %v700 = vpop.f32.mrb[0].mxu0
        %v701 = vadd.f32 %v660, %v700
        %v702 = vpop.f32.mrb[0].mxu0
        %v703 = vpop.f32.mrb[0].mxu0
        %v704 = vadd.f32 %v663, %v703
        %v705 = vpop.f32.mrb[0].mxu0
        %706 = vdwg.mxu0
        %707 = vmax.xlane.f32.xlu0 %v701
        %v708 = vpop.xlane.xlu0 %707
        %709 = vmax.xlane.f32.xlu0 %v704
        %v710 = vpop.xlane.xlu0 %709
        %v711 = vsub.f32 %v701, %v708
        %v712 = vsub.f32 %v704, %v710
        %v713 = vmul.f32 %v711, 1.442695
        %v714 = vpow.pop %v713
        %v715 = vmul.f32 %v712, 1.442695
        %v716 = vpow.pop %v715
        %717 = vadd.xlane.f32.xlu0 %v714
        %v718 = vpop.xlane.xlu0 %717
        %719 = vadd.xlane.f32.xlu0 %v716
        %v720 = vpop.xlane.xlu0 %719
        %v721 = vrcp.pop %v718
        %v722 = vrcp.pop %v720
        %v723 = vmul.f32 %v714, %v721
        %v724 = vmul.f32 %v716, %v722
        %v725 = vadd.f32 %v723, %v724
        %v726 = vmul.f32 %v725, 0.5
        %727 = vst [vmem:[%s166] sm:$0xff] %v726
        %s728 = sand.u32 %s93, 1
        %s729 = scalar_lea.sflag [#allocation3], %s728
        %s730 = sand.u32 %s93, 1
        %s731 = smul.addr %s730, 8
        %s732 = scalar_lea.vmem [#allocation2], %s731
        // Predicated region
        $region33: #{tta_forward_batch.1} parent=31 // pred_check
          %p733 = pneg %p103
        $region34: #{tta_forward_batch.1} parent=31 // pred_check_branch
          %735 = sbr.rel (%p733) target = $region36
        $region35: #{tta_forward_batch.1} parent=31 // pred_region
          %s737 = ssub.s32 128, 128
          %738 = vsyncadd %s729, %s737
          %s739 = smul.addr %s17, 128
          %s740 = scalar_lea.hbm %s3, %s739
          %s742 = sshll.u32 %s732, 4
          %s743 = int_to_ptr.vmem [resolvable:$true] %s742
          %745 = dma.vmem_to_hbm [thread:$0]  %s743, 128, %s740, %s729
        $region36: #{tta_forward_batch.1} parent=31 // pred_fallthru
          _
      $region32: #{tta_forward_batch.1} parent=5 // pred_fallthru
        _
      %p746 = scmp.le.s32.totalorder 2, %s12
      // Predicated region
      $region37: #{tta_forward_batch.1} parent=5 // pred_check
        %p747 = pneg %p746
      $region38: #{tta_forward_batch.1} parent=5 // pred_check_branch
        %749 = sbr.rel (%p747) target = $region40
      $region39: #{tta_forward_batch.1} parent=5 // pred_region
        %s750 = ssub.s32 %s12, 2
        // Predicated region
        $region41: #{tta_forward_batch.1} parent=39 // pred_check
          %p751 = pneg %p109
        $region42: #{tta_forward_batch.1} parent=39 // pred_check_branch
          %753 = sbr.rel (%p751) target = $region44
        $region43: #{tta_forward_batch.1} parent=39 // pred_region
          %s754 = sand.u32 %s94, 1
          %s755 = scalar_lea.sflag [#allocation3], %s754
          %s756 = sand.u32 %s94, 1
          %s757 = smul.addr %s756, 8
          %s758 = scalar_lea.vmem [#allocation2], %s757
          %759 = dma.done %s755, 128
        $region44: #{tta_forward_batch.1} parent=39 // pred_fallthru
          _
      $region40: #{tta_forward_batch.1} parent=5 // pred_fallthru
        _
    $region6: #{tta_forward_batch.1} parent=1 // loop_footer
      %s16 = sadd.s32 1, %s12
    $region7: #{tta_forward_batch.1} parent=1 // loop_footer_branch
      %11 = sbr.rel target = $region3
    $region8: #{tta_forward_batch.1} parent=1 // loop_exit
      _
    %760 = vsyncpa [#allocation3], 1
    %s761 = scalar_lea.sflag [#allocation3], 1
    %762 = vsyncpa %s761, 1

</llo_original>
